<compile_context>
chip_gen: v6e
topology: v6e:2x2x1
jax: 0.10.0
libtpu: 0.0.40
codegen_flags: <defaults>
</compile_context>

<pallas_src>
import jax
import jax.numpy as jnp
from jax.experimental import pallas as pl
from jax.experimental.pallas import tpu as pltpu


# Flat SMEM parameter layout (all f32), weights stored (in, out) row-major:
#   w1 (2,3) -> [0:6)    b1 (3,) -> [6:9)
#   w2 (3,3) -> [9:18)   b2 (3,) -> [18:21)
#   w3 (3,1) -> [21:24)  b3 (1,) -> [24:25)
_W1, _B1, _W2, _B2, _W3, _B3 = 0, 6, 9, 18, 21, 24

TILE_R = 256    # sublane-axis tile (multiple of 8)
TILE_C = 1024   # lane-axis tile (multiple of 128)


def mlp_kernel(params_ref, x_ref, o_ref):
    # params_ref: (25,) f32 in SMEM — scalar reads, broadcast by the VPU FMAs.
    # x_ref:      (2, TILE_R, C) f32 in VMEM — features leading, batch folded
    #             into a dense (sublane, lane) slab.
    # o_ref:      (TILE_R, C) f32 in VMEM — fully dense store.
    x0 = x_ref[0]                      # (TILE_R, C)
    x1 = x_ref[1]

    # layer1 + relu: three (TILE_R, C) slabs via VPU FMAs.
    h1 = []
    for j in range(3):
        a = (x0 * params_ref[_W1 + 0 * 3 + j]
             + x1 * params_ref[_W1 + 1 * 3 + j]
             + params_ref[_B1 + j])
        h1.append(jnp.maximum(a, 0.0))

    # layer2 + relu
    h2 = []
    for j in range(3):
        a = (h1[0] * params_ref[_W2 + 0 * 3 + j]
             + h1[1] * params_ref[_W2 + 1 * 3 + j]
             + h1[2] * params_ref[_W2 + 2 * 3 + j]
             + params_ref[_B2 + j])
        h2.append(jnp.maximum(a, 0.0))

    # layer3 (no activation), single dense store.
    o_ref[...] = (h2[0] * params_ref[_W3 + 0]
                  + h2[1] * params_ref[_W3 + 1]
                  + h2[2] * params_ref[_W3 + 2]
                  + params_ref[_B3])


def _pack_params(params):
    w1, b1, w2, b2, w3, b3 = params
    return jnp.concatenate([
        w1.reshape(-1), b1.reshape(-1),
        w2.reshape(-1), b2.reshape(-1),
        w3.reshape(-1), b3.reshape(-1),
    ]).astype(jnp.float32)


def _round_up(n, m):
    return ((n + m - 1) // m) * m


def mlp_forward(x, params, tile_r=TILE_R, tile_c=TILE_C):
    flat = _pack_params(params)                   # (25,) f32 -> SMEM
    B = x.shape[0]

    # Fold batch into a dense (R, C) slab; shrink tiles for small batches so we
    # don't pad tiny inputs up to MiB-scale blocks.
    c = min(tile_c, _round_up(B, 128))            # lane dim, multiple of 128
    rows = -(-B // c)                             # rows needed to cover B
    r_tile = min(tile_r, _round_up(rows, 8))      # sublane tile, multiple of 8
    r_total = _round_up(rows, r_tile)
    b_pad = r_total * c
    grid = (r_total // r_tile,)

    # One fused pad (no zeros+scatter); reshape (2, b_pad) -> (2, R, C) is free.
    xT = jnp.pad(x.T.astype(jnp.float32), ((0, 0), (0, b_pad - B)))
    xT = xT.reshape(2, r_total, c)

    y = pl.pallas_call(
        mlp_kernel,
        out_shape=jax.ShapeDtypeStruct((r_total, c), jnp.float32),
        grid=grid,
        in_specs=[
            pl.BlockSpec(memory_space=pltpu.MemorySpace.SMEM),   # packed params
            pl.BlockSpec((2, r_tile, c), lambda i: (0, i, 0)),   # x slab
        ],
        out_specs=pl.BlockSpec((r_tile, c), lambda i: (i, 0)),
        compiler_params=pltpu.CompilerParams(
            dimension_semantics=("parallel",)),
    )(flat, xT)

    # Padded lanes hold relu(b)-propagated garbage; slice them off before reshape.
    return y.reshape(b_pad)[:B].reshape(B, 1)


def init_params(key):
    # nn.Linear-equivalent params, stored transposed as (in, out); biases (1, out).
    k1, k2, k3, k4, k5, k6 = jax.random.split(key, 6)
    w1 = jax.random.normal(k1, (2, 3), jnp.float32) * 0.5
    b1 = jax.random.normal(k2, (1, 3), jnp.float32) * 0.1
    w2 = jax.random.normal(k3, (3, 3), jnp.float32) * 0.5
    b2 = jax.random.normal(k4, (1, 3), jnp.float32) * 0.1
    w3 = jax.random.normal(k5, (3, 1), jnp.float32) * 0.5
    b3 = jax.random.normal(k6, (1, 1), jnp.float32) * 0.1
    return (w1, b1, w2, b2, w3, b3)


def mlp_reference(x, params):
    w1, b1, w2, b2, w3, b3 = params
    h1 = jnp.maximum(x @ w1 + b1, 0.0)
    h2 = jnp.maximum(h1 @ w2 + b2, 0.0)
    return h2 @ w3 + b3


if __name__ == "__main__":
    key = jax.random.PRNGKey(0)
    kx, kx2, kp = jax.random.split(key, 3)
    params = init_params(kp)

    # Small primary check (batch=8, in_features=2).
    B = 8
    x = jax.random.normal(kx, (B, 2), jnp.float32)
    out = mlp_forward(x, params)
    jax.block_until_ready(out)
    ref = mlp_reference(x, params)
    assert out.shape == (B, 1)
    assert jnp.allclose(out, ref, atol=1e-5, rtol=1e-5)

    # Odd batch size to exercise the padding / fold-into-(R,C) path.
    B2 = 1029
    x2 = jax.random.normal(kx2, (B2, 2), jnp.float32)
    out2 = mlp_forward(x2, params)
    jax.block_until_ready(out2)
    ref2 = mlp_reference(x2, params)
    assert out2.shape == (B2, 1)
    assert jnp.allclose(out2, ref2, atol=1e-5, rtol=1e-5)

    print("KERNEL_OK")
</pallas_src>

<mosaic_0001>
module attributes {stable_mosaic.version = 11 : i64} {
  func.func @mlp_kernel(%arg0: i32, %arg1: memref<25xf32, #tpu.memory_space<smem>>, %arg2: memref<2x8x128xf32, #tpu.memory_space<vmem>>, %arg3: memref<8x128xf32, #tpu.memory_space<vmem>>) attributes {dimension_semantics = [#tpu.dimension_semantics<parallel>], iteration_bounds = array<i64: 1>, scalar_prefetch = 0 : i64, scratch_operands = 0 : i64, tpu.core_type = #tpu.core_type<tc>, window_params = [{transform_indices = @transform_0, window_bounds = array<i64: 25>}, {transform_indices = @transform_1, window_bounds = array<i64: 2, 8, 128>}, {transform_indices = @transform_2, window_bounds = array<i64: 8, 128>}]} {
    %c0 = arith.constant 0 : index
    %c0_0 = arith.constant 0 : index
    %c0_1 = arith.constant 0 : index
    %0 = vector.load %arg2[%c0, %c0_0, %c0_1] : memref<2x8x128xf32, #tpu.memory_space<vmem>>, vector<1x8x128xf32>
    %1 = vector.shape_cast %0 : vector<1x8x128xf32> to vector<8x128xf32>
    %c1 = arith.constant 1 : index
    %c0_2 = arith.constant 0 : index
    %c0_3 = arith.constant 0 : index
    %2 = vector.load %arg2[%c1, %c0_2, %c0_3] : memref<2x8x128xf32, #tpu.memory_space<vmem>>, vector<1x8x128xf32>
    %3 = vector.shape_cast %2 : vector<1x8x128xf32> to vector<8x128xf32>
    %c0_4 = arith.constant 0 : index
    %4 = memref.load %arg1[%c0_4] : memref<25xf32, #tpu.memory_space<smem>>
    %5 = vector.broadcast %4 : f32 to vector<8x128xf32>
    %6 = arith.mulf %1, %5 : vector<8x128xf32>
    %c3 = arith.constant 3 : index
    %7 = memref.load %arg1[%c3] : memref<25xf32, #tpu.memory_space<smem>>
    %8 = vector.broadcast %7 : f32 to vector<8x128xf32>
    %9 = arith.mulf %3, %8 : vector<8x128xf32>
    %10 = arith.addf %6, %9 : vector<8x128xf32>
    %c6 = arith.constant 6 : index
    %11 = memref.load %arg1[%c6] : memref<25xf32, #tpu.memory_space<smem>>
    %12 = vector.broadcast %11 : f32 to vector<8x128xf32>
    %13 = arith.addf %10, %12 : vector<8x128xf32>
    %cst = arith.constant 0.000000e+00 : f32
    %14 = vector.broadcast %cst : f32 to vector<8x128xf32>
    %15 = arith.maximumf %13, %14 : vector<8x128xf32>
    %c1_5 = arith.constant 1 : index
    %16 = memref.load %arg1[%c1_5] : memref<25xf32, #tpu.memory_space<smem>>
    %17 = vector.broadcast %16 : f32 to vector<8x128xf32>
    %18 = arith.mulf %1, %17 : vector<8x128xf32>
    %c4 = arith.constant 4 : index
    %19 = memref.load %arg1[%c4] : memref<25xf32, #tpu.memory_space<smem>>
    %20 = vector.broadcast %19 : f32 to vector<8x128xf32>
    %21 = arith.mulf %3, %20 : vector<8x128xf32>
    %22 = arith.addf %18, %21 : vector<8x128xf32>
    %c7 = arith.constant 7 : index
    %23 = memref.load %arg1[%c7] : memref<25xf32, #tpu.memory_space<smem>>
    %24 = vector.broadcast %23 : f32 to vector<8x128xf32>
    %25 = arith.addf %22, %24 : vector<8x128xf32>
    %cst_6 = arith.constant 0.000000e+00 : f32
    %26 = vector.broadcast %cst_6 : f32 to vector<8x128xf32>
    %27 = arith.maximumf %25, %26 : vector<8x128xf32>
    %c2 = arith.constant 2 : index
    %28 = memref.load %arg1[%c2] : memref<25xf32, #tpu.memory_space<smem>>
    %29 = vector.broadcast %28 : f32 to vector<8x128xf32>
    %30 = arith.mulf %1, %29 : vector<8x128xf32>
    %c5 = arith.constant 5 : index
    %31 = memref.load %arg1[%c5] : memref<25xf32, #tpu.memory_space<smem>>
    %32 = vector.broadcast %31 : f32 to vector<8x128xf32>
    %33 = arith.mulf %3, %32 : vector<8x128xf32>
    %34 = arith.addf %30, %33 : vector<8x128xf32>
    %c8 = arith.constant 8 : index
    %35 = memref.load %arg1[%c8] : memref<25xf32, #tpu.memory_space<smem>>
    %36 = vector.broadcast %35 : f32 to vector<8x128xf32>
    %37 = arith.addf %34, %36 : vector<8x128xf32>
    %cst_7 = arith.constant 0.000000e+00 : f32
    %38 = vector.broadcast %cst_7 : f32 to vector<8x128xf32>
    %39 = arith.maximumf %37, %38 : vector<8x128xf32>
    %c9 = arith.constant 9 : index
    %40 = memref.load %arg1[%c9] : memref<25xf32, #tpu.memory_space<smem>>
    %41 = vector.broadcast %40 : f32 to vector<8x128xf32>
    %42 = arith.mulf %15, %41 : vector<8x128xf32>
    %c12 = arith.constant 12 : index
    %43 = memref.load %arg1[%c12] : memref<25xf32, #tpu.memory_space<smem>>
    %44 = vector.broadcast %43 : f32 to vector<8x128xf32>
    %45 = arith.mulf %27, %44 : vector<8x128xf32>
    %46 = arith.addf %42, %45 : vector<8x128xf32>
    %c15 = arith.constant 15 : index
    %47 = memref.load %arg1[%c15] : memref<25xf32, #tpu.memory_space<smem>>
    %48 = vector.broadcast %47 : f32 to vector<8x128xf32>
    %49 = arith.mulf %39, %48 : vector<8x128xf32>
    %50 = arith.addf %46, %49 : vector<8x128xf32>
    %c18 = arith.constant 18 : index
    %51 = memref.load %arg1[%c18] : memref<25xf32, #tpu.memory_space<smem>>
    %52 = vector.broadcast %51 : f32 to vector<8x128xf32>
    %53 = arith.addf %50, %52 : vector<8x128xf32>
    %cst_8 = arith.constant 0.000000e+00 : f32
    %54 = vector.broadcast %cst_8 : f32 to vector<8x128xf32>
    %55 = arith.maximumf %53, %54 : vector<8x128xf32>
    %c10 = arith.constant 10 : index
    %56 = memref.load %arg1[%c10] : memref<25xf32, #tpu.memory_space<smem>>
    %57 = vector.broadcast %56 : f32 to vector<8x128xf32>
    %58 = arith.mulf %15, %57 : vector<8x128xf32>
    %c13 = arith.constant 13 : index
    %59 = memref.load %arg1[%c13] : memref<25xf32, #tpu.memory_space<smem>>
    %60 = vector.broadcast %59 : f32 to vector<8x128xf32>
    %61 = arith.mulf %27, %60 : vector<8x128xf32>
    %62 = arith.addf %58, %61 : vector<8x128xf32>
    %c16 = arith.constant 16 : index
    %63 = memref.load %arg1[%c16] : memref<25xf32, #tpu.memory_space<smem>>
    %64 = vector.broadcast %63 : f32 to vector<8x128xf32>
    %65 = arith.mulf %39, %64 : vector<8x128xf32>
    %66 = arith.addf %62, %65 : vector<8x128xf32>
    %c19 = arith.constant 19 : index
    %67 = memref.load %arg1[%c19] : memref<25xf32, #tpu.memory_space<smem>>
    %68 = vector.broadcast %67 : f32 to vector<8x128xf32>
    %69 = arith.addf %66, %68 : vector<8x128xf32>
    %cst_9 = arith.constant 0.000000e+00 : f32
    %70 = vector.broadcast %cst_9 : f32 to vector<8x128xf32>
    %71 = arith.maximumf %69, %70 : vector<8x128xf32>
    %c11 = arith.constant 11 : index
    %72 = memref.load %arg1[%c11] : memref<25xf32, #tpu.memory_space<smem>>
    %73 = vector.broadcast %72 : f32 to vector<8x128xf32>
    %74 = arith.mulf %15, %73 : vector<8x128xf32>
    %c14 = arith.constant 14 : index
    %75 = memref.load %arg1[%c14] : memref<25xf32, #tpu.memory_space<smem>>
    %76 = vector.broadcast %75 : f32 to vector<8x128xf32>
    %77 = arith.mulf %27, %76 : vector<8x128xf32>
    %78 = arith.addf %74, %77 : vector<8x128xf32>
    %c17 = arith.constant 17 : index
    %79 = memref.load %arg1[%c17] : memref<25xf32, #tpu.memory_space<smem>>
    %80 = vector.broadcast %79 : f32 to vector<8x128xf32>
    %81 = arith.mulf %39, %80 : vector<8x128xf32>
    %82 = arith.addf %78, %81 : vector<8x128xf32>
    %c20 = arith.constant 20 : index
    %83 = memref.load %arg1[%c20] : memref<25xf32, #tpu.memory_space<smem>>
    %84 = vector.broadcast %83 : f32 to vector<8x128xf32>
    %85 = arith.addf %82, %84 : vector<8x128xf32>
    %cst_10 = arith.constant 0.000000e+00 : f32
    %86 = vector.broadcast %cst_10 : f32 to vector<8x128xf32>
    %87 = arith.maximumf %85, %86 : vector<8x128xf32>
    %c21 = arith.constant 21 : index
    %88 = memref.load %arg1[%c21] : memref<25xf32, #tpu.memory_space<smem>>
    %89 = vector.broadcast %88 : f32 to vector<8x128xf32>
    %90 = arith.mulf %55, %89 : vector<8x128xf32>
    %c22 = arith.constant 22 : index
    %91 = memref.load %arg1[%c22] : memref<25xf32, #tpu.memory_space<smem>>
    %92 = vector.broadcast %91 : f32 to vector<8x128xf32>
    %93 = arith.mulf %71, %92 : vector<8x128xf32>
    %94 = arith.addf %90, %93 : vector<8x128xf32>
    %c23 = arith.constant 23 : index
    %95 = memref.load %arg1[%c23] : memref<25xf32, #tpu.memory_space<smem>>
    %96 = vector.broadcast %95 : f32 to vector<8x128xf32>
    %97 = arith.mulf %87, %96 : vector<8x128xf32>
    %98 = arith.addf %94, %97 : vector<8x128xf32>
    %c24 = arith.constant 24 : index
    %99 = memref.load %arg1[%c24] : memref<25xf32, #tpu.memory_space<smem>>
    %100 = vector.broadcast %99 : f32 to vector<8x128xf32>
    %101 = arith.addf %98, %100 : vector<8x128xf32>
    %c0_11 = arith.constant 0 : index
    %c0_12 = arith.constant 0 : index
    %102 = vector.load %arg3[%c0_11, %c0_12] : memref<8x128xf32, #tpu.memory_space<vmem>>, vector<8x128xf32>
    tpu.vector_store %arg3[%c0_11, %c0_12], %101 {strides = array<i32>} : memref<8x128xf32, #tpu.memory_space<vmem>>, vector<8x128xf32>,
    return
  }
  func.func @transform_0(%arg0: i32) -> i32 {
    %c0_i32 = arith.constant 0 : i32
    %c0_i32_0 = arith.constant 0 : i32
    return %c0_i32 : i32
  }
  func.func @transform_1(%arg0: i32) -> (i32, i32, i32) {
    %c0_i32 = arith.constant 0 : i32
    %c0_i32_0 = arith.constant 0 : i32
    %c0_i32_1 = arith.constant 0 : i32
    return %c0_i32, %arg0, %c0_i32_0 : i32, i32, i32
  }
  func.func @transform_2(%arg0: i32) -> (i32, i32) {
    %c0_i32 = arith.constant 0 : i32
    %c0_i32_0 = arith.constant 0 : i32
    return %arg0, %c0_i32 : i32, i32
  }
}

</mosaic_0001>

<llo_original>
// kernel: tpu_custom_call.1
$region0: #{tpu_custom_call.1}
  #allocation0 [shape = 'u32[]', space=smem, size = 0x4, offset = 0x4, fixed_abs, tag = 'smem constant byte address 0x4 - core index']
  #allocation1 [shape = 'u32[144,128]{1,0:T(1,128)}', space=vmem, size = 0x12000, scoped, tag = 'internal scratch']
  %s0 = inlined_call_operand.hbm [shape: f32[25], index: 0, kind: input, shape index: {}]
  %s1 = inlined_call_operand.hbm [shape: f32[2,8,128], index: 1, kind: input, shape index: {}]
  %s2 = inlined_call_operand.hbm [shape: f32[8,128], index: 2, kind: output, shape index: {}]
  %s3 = sld [smem:[#allocation0]]
  $region26: #{tpu_custom_call.1} parent=0
    _
  %s5 = ssub.s32 1, %s3
  %s6 = scalar_select 0, %s5, %s3
  $region1: #{tpu_custom_call.1} parent=0
    #allocation2 [shape = 'u8[512]{0}', space=smem, size = 0x200, scoped, tag = 'input window, operand 0, single buffered']
    #allocation3 [shape = 's32[1]{0}', space=sflag, size = 0x4, scoped, tag = 'scoped memory for tpu_custom_call.1']
    #allocation4 [shape = 's32[1]{0}', space=sflag, size = 0x4, scoped, tag = 'scoped memory for tpu_custom_call.1']
    #allocation5 [shape = 's32[1]{0}', space=sflag, size = 0x4, scoped, tag = 'scoped memory for tpu_custom_call.1']
    #allocation6 [shape = 'u8[8192]{0}', space=vmem, size = 0x2000, scoped, tag = 'input window, operand 1, single buffered']
    #allocation7 [shape = 'u8[4096]{0}', space=vmem, size = 0x1000, scoped, tag = 'output window, operand 0, single buffered']
    %7 = vsyncpa [#allocation5], 0
    %8 = vsyncpa [#allocation3], 0
    %9 = vsyncpa [#allocation4], 0
    // Predicated region
    $region2: #{tpu_custom_call.1} parent=1 // pred_check
      _
    $region3: #{tpu_custom_call.1} parent=1 // pred_check_branch
      %11 = sbr.rel (0) target = $region5
    $region4: #{tpu_custom_call.1} parent=1 // pred_region
      %s13 = ssub.s32 16, 16
      %14 = vsyncadd [#allocation5], %s13
      %17 = dma.hbm_to_smem %s0, 16, [#allocation2], [#allocation5]
    $region5: #{tpu_custom_call.1} parent=1 // pred_fallthru
      _
    // Predicated region
    $region6: #{tpu_custom_call.1} parent=1 // pred_check
      _
    $region7: #{tpu_custom_call.1} parent=1 // pred_check_branch
      %19 = sbr.rel (0) target = $region9
    $region8: #{tpu_custom_call.1} parent=1 // pred_region
      %s21 = ssub.s32 256, 256
      %22 = vsyncadd [#allocation3], %s21
      %s23 = sshll.u32 [#allocation6], 4
      %s24 = int_to_ptr.vmem [resolvable:$true] %s23
      %29 = dma.hbm_to_vmem [thread:$0]  %s1, 256, %s24, [#allocation3], 128, 128, 8
    $region9: #{tpu_custom_call.1} parent=1 // pred_fallthru
      _
    // Predicated region
    $region10: #{tpu_custom_call.1} parent=1 // pred_check
      _
    $region11: #{tpu_custom_call.1} parent=1 // pred_check_branch
      %31 = sbr.rel (0) target = $region13
    $region12: #{tpu_custom_call.1} parent=1 // pred_region
      %32 = dma.done [#allocation5], 16
    $region13: #{tpu_custom_call.1} parent=1 // pred_fallthru
      _
    // Predicated region
    $region14: #{tpu_custom_call.1} parent=1 // pred_check
      _
    $region15: #{tpu_custom_call.1} parent=1 // pred_check_branch
      %34 = sbr.rel (0) target = $region17
    $region16: #{tpu_custom_call.1} parent=1 // pred_region
      %35 = dma.done [#allocation3], 256
    $region17: #{tpu_custom_call.1} parent=1 // pred_fallthru
      _
    %36 = sfence
    %v37 = vld [vmem:[#allocation6] sm:$0xff]
    %s38 = scalar_lea.vmem [#allocation6], 8
    %v39 = vld [vmem:[%s38] sm:$0xff]
    %s40 = sld [smem:[#allocation2]]
    %v41 = vstv %s40
    %v42 = vmul.f32 %v37, %v41
    %s43 = sld [smem:[#allocation2 + $0x3]]
    %v44 = vstv %s43
    %v45 = vmul.f32 %v39, %v44
    %v46 = vadd.f32 %v42, %v45
    %s47 = sld [smem:[#allocation2 + $0x6]]
    %v48 = vstv %s47
    %v49 = vadd.f32 %v46, %v48
    %v50 = vmax.f32 %v49, 0.0
    %s51 = sld [smem:[#allocation2 + $0x1]]
    %v52 = vstv %s51
    %v53 = vmul.f32 %v37, %v52
    %s54 = sld [smem:[#allocation2 + $0x4]]
    %v55 = vstv %s54
    %v56 = vmul.f32 %v39, %v55
    %v57 = vadd.f32 %v53, %v56
    %s58 = sld [smem:[#allocation2 + $0x7]]
    %v59 = vstv %s58
    %v60 = vadd.f32 %v57, %v59
    %v61 = vmax.f32 %v60, 0.0
    %s62 = sld [smem:[#allocation2 + $0x2]]
    %v63 = vstv %s62
    %v64 = vmul.f32 %v37, %v63
    %s65 = sld [smem:[#allocation2 + $0x5]]
    %v66 = vstv %s65
    %v67 = vmul.f32 %v39, %v66
    %v68 = vadd.f32 %v64, %v67
    %s69 = sld [smem:[#allocation2 + $0x8]]
    %v70 = vstv %s69
    %v71 = vadd.f32 %v68, %v70
    %v72 = vmax.f32 %v71, 0.0
    %s73 = sld [smem:[#allocation2 + $0x9]]
    %v74 = vstv %s73
    %v75 = vmul.f32 %v50, %v74
    %s76 = sld [smem:[#allocation2 + $0xc]]
    %v77 = vstv %s76
    %v78 = vmul.f32 %v61, %v77
    %v79 = vadd.f32 %v75, %v78
    %s80 = sld [smem:[#allocation2 + $0xf]]
    %v81 = vstv %s80
    %v82 = vmul.f32 %v72, %v81
    %v83 = vadd.f32 %v79, %v82
    %s84 = sld [smem:[#allocation2 + $0x12]]
    %v85 = vstv %s84
    %v86 = vadd.f32 %v83, %v85
    %v87 = vmax.f32 %v86, 0.0
    %s88 = sld [smem:[#allocation2 + $0xa]]
    %v89 = vstv %s88
    %v90 = vmul.f32 %v50, %v89
    %s91 = sld [smem:[#allocation2 + $0xd]]
    %v92 = vstv %s91
    %v93 = vmul.f32 %v61, %v92
    %v94 = vadd.f32 %v90, %v93
    %s95 = sld [smem:[#allocation2 + $0x10]]
    %v96 = vstv %s95
    %v97 = vmul.f32 %v72, %v96
    %v98 = vadd.f32 %v94, %v97
    %s99 = sld [smem:[#allocation2 + $0x13]]
    %v100 = vstv %s99
    %v101 = vadd.f32 %v98, %v100
    %v102 = vmax.f32 %v101, 0.0
    %s103 = sld [smem:[#allocation2 + $0xb]]
    %v104 = vstv %s103
    %v105 = vmul.f32 %v50, %v104
    %s106 = sld [smem:[#allocation2 + $0xe]]
    %v107 = vstv %s106
    %v108 = vmul.f32 %v61, %v107
    %v109 = vadd.f32 %v105, %v108
    %s110 = sld [smem:[#allocation2 + $0x11]]
    %v111 = vstv %s110
    %v112 = vmul.f32 %v72, %v111
    %v113 = vadd.f32 %v109, %v112
    %s114 = sld [smem:[#allocation2 + $0x14]]
    %v115 = vstv %s114
    %v116 = vadd.f32 %v113, %v115
    %v117 = vmax.f32 %v116, 0.0
    %s118 = sld [smem:[#allocation2 + $0x15]]
    %v119 = vstv %s118
    %v120 = vmul.f32 %v87, %v119
    %s121 = sld [smem:[#allocation2 + $0x16]]
    %v122 = vstv %s121
    %v123 = vmul.f32 %v102, %v122
    %v124 = vadd.f32 %v120, %v123
    %s125 = sld [smem:[#allocation2 + $0x17]]
    %v126 = vstv %s125
    %v127 = vmul.f32 %v117, %v126
    %v128 = vadd.f32 %v124, %v127
    %s129 = sld [smem:[#allocation2 + $0x18]]
    %v130 = vstv %s129
    %v131 = vadd.f32 %v128, %v130
    %132 = vst [vmem:[#allocation7] sm:$0xff] %v131
    // Predicated region
    $region18: #{tpu_custom_call.1} parent=1 // pred_check
      _
    $region19: #{tpu_custom_call.1} parent=1 // pred_check_branch
      %134 = sbr.rel (0) target = $region21
    $region20: #{tpu_custom_call.1} parent=1 // pred_region
      %s136 = ssub.s32 128, 128
      %137 = vsyncadd [#allocation4], %s136
      %s139 = sshll.u32 [#allocation7], 4
      %s140 = int_to_ptr.vmem [resolvable:$true] %s139
      %142 = dma.vmem_to_hbm [thread:$0]  %s140, 128, %s2, [#allocation4]
    $region21: #{tpu_custom_call.1} parent=1 // pred_fallthru
      _
    // Predicated region
    $region22: #{tpu_custom_call.1} parent=1 // pred_check
      _
    $region23: #{tpu_custom_call.1} parent=1 // pred_check_branch
      %144 = sbr.rel (0) target = $region25
    $region24: #{tpu_custom_call.1} parent=1 // pred_region
      %145 = dma.done [#allocation4], 128
    $region25: #{tpu_custom_call.1} parent=1 // pred_fallthru
      _
    %146 = vsyncpa [#allocation3], 1
    %147 = vsyncpa [#allocation4], 1
    %148 = vsyncpa [#allocation5], 1

</llo_original>
